<compile_context>
chip_gen: v7x
topology: tpu7x:2x2x1
jax: 0.10.0
libtpu: 0.0.40
codegen_flags: <defaults>
</compile_context>

<pallas_src>
import numpy as np
import jax
import jax.numpy as jnp
from jax.experimental import pallas as pl
from jax.experimental.pallas import tpu as pltpu

_LANES = 384                     # 3 * 128: one row == 128 xyz points
_TILE_ROWS = 512                 # 512 rows * 384 lanes * 4 B = 0.75 MiB / buffer
_MIN_POINTS_FOR_PALLAS = 1024    # below this, XLA's fused elementwise path wins
_SHIFTS = (-2, -1, 0, 1, 2)      # in-row lane offsets needed for a 3x3 map


def _transform_kernel(coef_ref, x_ref, o_ref):
    """out[j] = coef_t[j] + sum_d coef_d[j] * x[j + d]   (row-local lanes).

    coef_ref row 0 is the per-lane translation, rows 1..5 the per-lane R
    coefficients for d = -2..2.  Wrapped lanes of the rolled copies are only
    ever multiplied by a zero coefficient, so there is no cross-row leakage.
    """
    x = x_ref[...].astype(jnp.float32)                 # (tile_rows, 384)
    n = x.shape[-1]
    acc = coef_ref[0:1, :]                             # translation row (1, 384)
    for idx, d in enumerate(_SHIFTS):
        coef = coef_ref[idx + 1:idx + 2, :]            # (1, 384)
        xs = x if d == 0 else pltpu.roll(x, (-d) % n, axis=1)   # xs[j] = x[j + d]
        acc = acc + coef * xs
    o_ref[...] = acc.astype(o_ref.dtype)


def _phase_coefficients(Rf, tf):
    """(8, 384) f32: row 0 = t by lane phase; rows 1..5 = R coefficients for
    lane shifts d = -2..2; rows 6..7 are sublane padding."""
    phase = jnp.arange(_LANES, dtype=jnp.int32) % 3          # lane -> coordinate
    cs = jnp.arange(3, dtype=jnp.int32)
    rows = [tf[phase]]
    for d in _SHIFTS:
        k = cs + d
        valid = (k >= 0) & (k < 3)
        per_phase = jnp.where(valid, Rf[cs, jnp.clip(k, 0, 2)], 0.0)   # (3,)
        rows.append(per_phase[phase])
    rows += [jnp.zeros((_LANES,), jnp.float32)] * 2
    return jnp.stack(rows, axis=0)


def _pick_tile_rows(rows, tile_rows_max):
    # Keep >= ~8 grid steps (double-buffered pipelining + v7x megacore split)
    # while never dropping below 128 rows/block (per-step overhead) nor
    # exceeding the array.  rows >= 8 on this path.
    tr = max(128, pl.cdiv(rows, 8))
    tr = min(tr, int(tile_rows_max), rows)
    return max(8, (tr // 8) * 8)             # sublane-aligned


def _transform_pallas(x2, coef, out_dtype, tile_rows_max):
    rows = x2.shape[0]
    tile_rows = _pick_tile_rows(rows, tile_rows_max)
    grid = (pl.cdiv(rows, tile_rows),)
    itemsize = jnp.dtype(out_dtype).itemsize
    cost = pl.CostEstimate(flops=21 * rows * 128, transcendentals=0,
                           bytes_accessed=2 * rows * _LANES * itemsize)
    return pl.pallas_call(
        _transform_kernel,
        out_shape=jax.ShapeDtypeStruct((rows, _LANES), out_dtype),
        grid=grid,
        in_specs=[
            pl.BlockSpec((8, _LANES), lambda i: (0, 0)),            # coef (VMEM)
            pl.BlockSpec((tile_rows, _LANES), lambda i: (i, 0)),    # points
        ],
        out_specs=pl.BlockSpec((tile_rows, _LANES), lambda i: (i, 0)),
        compiler_params=pltpu.CompilerParams(
            dimension_semantics=("parallel",),
            vmem_limit_bytes=32 * 1024 * 1024),
        cost_estimate=cost,
    )(coef, x2)


def transform_layer(x, R, t, *, tile_rows=_TILE_ROWS,
                    min_points_for_pallas=_MIN_POINTS_FOR_PALLAS):
    """Pallas equivalent of TransformLayer.forward: x @ R.T + t  (x: (..., 3))."""
    orig_shape = x.shape
    assert orig_shape[-1] == 3, "last dim must be 3"
    M = int(np.prod(orig_shape[:-1])) if len(orig_shape) > 1 else 1

    Rf = jnp.asarray(R, jnp.float32).reshape(3, 3)
    tf = jnp.asarray(t, jnp.float32).reshape(3)

    def jnp_path(pts):                        # f32 math, like the kernel
        return (pts.astype(jnp.float32) @ Rf.T + tf).astype(x.dtype)

    if M < min_points_for_pallas:
        # Kernel launch + per-step overhead dominates tiny inputs.
        return jnp_path(x)

    coef = _phase_coefficients(Rf, tf)
    m_main = (M // 128) * 128                 # 128-point-aligned prefix
    n_tail = M - m_main
    rows = m_main // 128

    x_flat = x.reshape(M * 3)                 # contiguous reshape: metadata only

    if n_tail == 0:
        out = _transform_pallas(x_flat.reshape(rows, _LANES), coef,
                                x.dtype, tile_rows)
        return out.reshape(orig_shape)

    # Ragged tail: Pallas on the aligned prefix, tiny jnp path on the tail.
    # No full-array pad / output slice passes anymore.
    # TODO(synk): the final concatenate still re-writes the output once; a
    # fully in-kernel ragged tail (scalar-prefetched M + masked last-block
    # store) would remove that pass as well.
    x2 = x_flat[:m_main * 3].reshape(rows, _LANES)
    out_main = _transform_pallas(x2, coef, x.dtype, tile_rows)
    out_tail = jnp_path(x_flat[m_main * 3:].reshape(n_tail, 3))
    out_flat = jnp.concatenate([out_main.reshape(m_main * 3),
                                out_tail.reshape(n_tail * 3)])
    return out_flat.reshape(orig_shape)


if __name__ == "__main__":
    # Deterministic transform: rotation about z by 30 degrees + translation.
    theta = np.pi / 6.0
    T_np = np.eye(4, dtype=np.float32)
    T_np[:3, :3] = np.array(
        [[np.cos(theta), -np.sin(theta), 0.0],
         [np.sin(theta),  np.cos(theta), 0.0],
         [0.0,            0.0,           1.0]], dtype=np.float32)
    T_np[:3, 3] = np.array([0.5, -1.0, 2.0], dtype=np.float32)

    R = jnp.asarray(T_np[:3, :3])
    t = jnp.asarray(T_np[:3, 3])

    key = jax.random.PRNGKey(0)
    k1, k2, k3, k4 = jax.random.split(key, 4)

    cases = {
        # aligned multi-tile Pallas path: M = 65536 points
        "pallas_multi_tile": jax.random.normal(k1, (4, 16384, 3), jnp.float32),
        # aligned M but rows not divisible by the tile (partial last block)
        "pallas_partial_block": jax.random.normal(k2, (37, 128, 3), jnp.float32),
        # ragged Pallas path: M = 2000 points (80-point jnp tail, no padding)
        "pallas_ragged": jax.random.normal(k3, (2, 1000, 3), jnp.float32),
        # tiny input -> plain jnp fallback
        "jnp_fallback": jax.random.normal(k4, (2, 16, 3), jnp.float32),
    }

    for name, x in cases.items():
        y = jax.block_until_ready(transform_layer(x, R, t))
        y_ref = x @ R.T + t
        np.testing.assert_allclose(np.asarray(y), np.asarray(y_ref),
                                   rtol=1e-5, atol=1e-5, err_msg=name)

    print("KERNEL_OK")
</pallas_src>

<mosaic_0001>
module attributes {stable_mosaic.version = 11 : i64} {
  func.func @_transform_kernel(%arg0: i32, %arg1: memref<8x384xf32, #tpu.memory_space<vmem>>, %arg2: memref<128x384xf32, #tpu.memory_space<vmem>>, %arg3: memref<128x384xf32, #tpu.memory_space<vmem>>) attributes {dimension_semantics = [#tpu.dimension_semantics<parallel>], iteration_bounds = array<i64: 4>, scalar_prefetch = 0 : i64, scratch_operands = 0 : i64, tpu.core_type = #tpu.core_type<tc>, window_params = [{pipeline_mode = #tpu.pipeline_mode<synchronous>, transform_indices = @transform_0, window_bounds = array<i64: 8, 384>}, {transform_indices = @transform_1, window_bounds = array<i64: 128, 384>}, {transform_indices = @transform_2, window_bounds = array<i64: 128, 384>}]} {
    %c0 = arith.constant 0 : index
    %c0_0 = arith.constant 0 : index
    %0 = vector.load %arg2[%c0, %c0_0] : memref<128x384xf32, #tpu.memory_space<vmem>>, vector<128x384xf32>
    %c0_1 = arith.constant 0 : index
    %c0_2 = arith.constant 0 : index
    %1 = vector.load %arg1[%c0_1, %c0_2] : memref<8x384xf32, #tpu.memory_space<vmem>>, vector<1x384xf32>
    %c1 = arith.constant 1 : index
    %c0_3 = arith.constant 0 : index
    %2 = vector.load %arg1[%c1, %c0_3] : memref<8x384xf32, #tpu.memory_space<vmem>>, vector<1x384xf32>
    %c2_i32 = arith.constant 2 : i32
    %3 = tpu.dynamic_rotate %0 by %c2_i32 dim 1 : vector<128x384xf32>, i32 -> vector<128x384xf32>
    %4 = vector.broadcast %2 : vector<1x384xf32> to vector<128x384xf32>
    %5 = arith.mulf %4, %3 : vector<128x384xf32>
    %6 = vector.broadcast %1 : vector<1x384xf32> to vector<128x384xf32>
    %7 = arith.addf %6, %5 : vector<128x384xf32>
    %c2 = arith.constant 2 : index
    %c0_4 = arith.constant 0 : index
    %8 = vector.load %arg1[%c2, %c0_4] : memref<8x384xf32, #tpu.memory_space<vmem>>, vector<1x384xf32>
    %c1_i32 = arith.constant 1 : i32
    %9 = tpu.dynamic_rotate %0 by %c1_i32 dim 1 : vector<128x384xf32>, i32 -> vector<128x384xf32>
    %10 = vector.broadcast %8 : vector<1x384xf32> to vector<128x384xf32>
    %11 = arith.mulf %10, %9 : vector<128x384xf32>
    %12 = arith.addf %7, %11 : vector<128x384xf32>
    %c3 = arith.constant 3 : index
    %c0_5 = arith.constant 0 : index
    %13 = vector.load %arg1[%c3, %c0_5] : memref<8x384xf32, #tpu.memory_space<vmem>>, vector<1x384xf32>
    %14 = vector.broadcast %13 : vector<1x384xf32> to vector<128x384xf32>
    %15 = arith.mulf %14, %0 : vector<128x384xf32>
    %16 = arith.addf %12, %15 : vector<128x384xf32>
    %c4 = arith.constant 4 : index
    %c0_6 = arith.constant 0 : index
    %17 = vector.load %arg1[%c4, %c0_6] : memref<8x384xf32, #tpu.memory_space<vmem>>, vector<1x384xf32>
    %c383_i32 = arith.constant 383 : i32
    %18 = tpu.dynamic_rotate %0 by %c383_i32 dim 1 : vector<128x384xf32>, i32 -> vector<128x384xf32>
    %19 = vector.broadcast %17 : vector<1x384xf32> to vector<128x384xf32>
    %20 = arith.mulf %19, %18 : vector<128x384xf32>
    %21 = arith.addf %16, %20 : vector<128x384xf32>
    %c5 = arith.constant 5 : index
    %c0_7 = arith.constant 0 : index
    %22 = vector.load %arg1[%c5, %c0_7] : memref<8x384xf32, #tpu.memory_space<vmem>>, vector<1x384xf32>
    %c382_i32 = arith.constant 382 : i32
    %23 = tpu.dynamic_rotate %0 by %c382_i32 dim 1 : vector<128x384xf32>, i32 -> vector<128x384xf32>
    %24 = vector.broadcast %22 : vector<1x384xf32> to vector<128x384xf32>
    %25 = arith.mulf %24, %23 : vector<128x384xf32>
    %26 = arith.addf %21, %25 : vector<128x384xf32>
    %c0_8 = arith.constant 0 : index
    %c0_9 = arith.constant 0 : index
    %27 = vector.load %arg3[%c0_8, %c0_9] : memref<128x384xf32, #tpu.memory_space<vmem>>, vector<128x384xf32>
    tpu.vector_store %arg3[%c0_8, %c0_9], %26 {strides = array<i32>} : memref<128x384xf32, #tpu.memory_space<vmem>>, vector<128x384xf32>,
    return
  }
  func.func @transform_0(%arg0: i32) -> (i32, i32) {
    %c0_i32 = arith.constant 0 : i32
    %c0_i32_0 = arith.constant 0 : i32
    %c0_i32_1 = arith.constant 0 : i32
    return %c0_i32, %c0_i32_0 : i32, i32
  }
  func.func @transform_1(%arg0: i32) -> (i32, i32) {
    %c0_i32 = arith.constant 0 : i32
    %c0_i32_0 = arith.constant 0 : i32
    return %arg0, %c0_i32 : i32, i32
  }
  func.func @transform_2(%arg0: i32) -> (i32, i32) {
    %c0_i32 = arith.constant 0 : i32
    %c0_i32_0 = arith.constant 0 : i32
    return %arg0, %c0_i32 : i32, i32
  }
}

</mosaic_0001>

<llo_original>
// kernel: tpu_custom_call.1
$region0: #{tpu_custom_call.1}
  #allocation0 [shape = 'u32[]', space=smem, size = 0x4, offset = 0x4, fixed_abs, tag = 'smem constant byte address 0x4 - core index']
  #allocation1 [shape = 'u32[144,128]{1,0:T(1,128)}', space=vmem, size = 0x12000, scoped, tag = 'internal scratch']
  %s0 = inlined_call_operand.hbm [shape: f32[8,384], index: 0, kind: input, shape index: {}]
  %s1 = inlined_call_operand.hbm [shape: f32[512,384], index: 1, kind: input, shape index: {}]
  %s2 = inlined_call_operand.hbm [shape: f32[512,384], index: 2, kind: output, shape index: {}]
  %s3 = sld [smem:[#allocation0]]
  $region49: #{tpu_custom_call.1} parent=0
    _
  %s5 = ssub.s32 1, %s3
  %s6 = scalar_select 0, %s5, %s3
  $region1: #{tpu_custom_call.1} parent=0
    #allocation2 [shape = 'u8[12288]{0}', space=vmem, size = 0x3000, scoped, tag = 'input window, operand 0, single buffered']
    #allocation3 [shape = 's32[2]{0}', space=sflag, size = 0x8, scoped, tag = 'scoped memory for tpu_custom_call.1']
    #allocation4 [shape = 's32[2]{0}', space=sflag, size = 0x8, scoped, tag = 'scoped memory for tpu_custom_call.1']
    #allocation5 [shape = 'u8[393216]{0}', space=vmem, size = 0x60000, scoped, tag = 'input window, operand 1']
    #allocation6 [shape = 's32[2]{0}', space=sflag, size = 0x8, scoped, tag = 'scoped memory for tpu_custom_call.1']
    #allocation7 [shape = 'u8[393216]{0}', space=vmem, size = 0x60000, scoped, tag = 'output window, operand 0']
    %7 = vsyncpa [#allocation3], 0
    %8 = vsyncpa [#allocation6], 0
    %s9 = scalar_lea.sflag [#allocation6], 1
    %10 = vsyncpa %s9, 0
    %11 = vsyncpa [#allocation4], 0
    %s12 = scalar_lea.sflag [#allocation4], 1
    %13 = vsyncpa %s12, 0
    loop: start=0, step=1, limit=6
    $region2: #{tpu_custom_call.1} parent=1 // loop_pre_header
      _
    $region3: #{tpu_custom_call.1} parent=1 // loop_header
      %s15 = sphi 0, %s19
      %p16 = scmp.ge.s32.totalorder %s15, 6
      %s23 = sphi 0, %s23
      %s25 = sphi 0, %s23
      %s26 = sphi 0, %s25
      %s40 = sphi 0, %s26
      %s46 = sphi 0, %s48
      %s49 = sphi 0, %s46
      %s50 = sphi 0, %s49
      %s66 = sphi 0, %s50
      %s72 = sphi 0, %s74
      %s75 = sphi 0, %s72
      %s76 = sphi 0, %s75
      %s92 = sphi 0, %s76
    $region4: #{tpu_custom_call.1} parent=1 // loop_header_branch
      %18 = sbr.rel (%p16) target = $region8
    $region5: #{tpu_custom_call.1} parent=1 // loop_body
      %s20 = ssub.s32 %s15, 1
      %s21 = ssub.s32 %s15, 2
      %s22 = sadd.s32 %s15, 1
      %s24 = sadd.s32 %s23, 1
      %p27 = scmp.eq.s32.totalorder %s15, 3
      %p28 = scmp.ne.s32.totalorder %s23, %s25
      %p29 = scmp.eq.s32.totalorder %s15, 0
      %p30 = por %p28, %p29
      %p31 = scmp.ne.s32.totalorder %s23, %s25
      %p32 = scmp.eq.s32.totalorder %s20, 3
      %p33 = por %p31, %p32
      %p34 = scmp.ne.s32.totalorder %s25, %s26
      %p35 = scmp.eq.s32.totalorder %s20, 0
      %p36 = por %p34, %p35
      %p37 = scmp.ne.s32.totalorder %s25, %s26
      %p38 = scmp.eq.s32.totalorder %s21, 3
      %p39 = por %p37, %p38
      %p41 = scmp.ne.s32.totalorder %s26, %s40
      %p42 = scmp.eq.s32.totalorder %s21, 0
      %p43 = por %p41, %p42
      %s44 = ssub.s32 %s15, %s22
      %p45 = scmp.eq.s32.totalorder %s44, 0
      %s47 = sadd.s32 %s46, 1
      %s48 = scalar_select %p45, %s46, %s47
      %p51 = pneg %p45
      %p52 = scmp.eq.s32.totalorder %s15, 3
      %p53 = por %p51, %p52
      %p54 = scmp.ne.s32.totalorder %s46, %s49
      %p55 = scmp.eq.s32.totalorder %s15, 0
      %p56 = por %p54, %p55
      %p57 = scmp.ne.s32.totalorder %s46, %s49
      %p58 = scmp.eq.s32.totalorder %s20, 3
      %p59 = por %p57, %p58
      %p60 = scmp.ne.s32.totalorder %s49, %s50
      %p61 = scmp.eq.s32.totalorder %s20, 0
      %p62 = por %p60, %p61
      %p63 = scmp.ne.s32.totalorder %s49, %s50
      %p64 = scmp.eq.s32.totalorder %s21, 3
      %p65 = por %p63, %p64
      %p67 = scmp.ne.s32.totalorder %s50, %s66
      %p68 = scmp.eq.s32.totalorder %s21, 0
      %p69 = por %p67, %p68
      %s70 = ssub.s32 %s15, %s22
      %p71 = scmp.eq.s32.totalorder %s70, 0
      %s73 = sadd.s32 %s72, 1
      %s74 = scalar_select %p71, %s72, %s73
      %p77 = pneg %p71
      %p78 = scmp.eq.s32.totalorder %s15, 3
      %p79 = por %p77, %p78
      %p80 = scmp.ne.s32.totalorder %s72, %s75
      %p81 = scmp.eq.s32.totalorder %s15, 0
      %p82 = por %p80, %p81
      %p83 = scmp.ne.s32.totalorder %s72, %s75
      %p84 = scmp.eq.s32.totalorder %s20, 3
      %p85 = por %p83, %p84
      %p86 = scmp.ne.s32.totalorder %s75, %s76
      %p87 = scmp.eq.s32.totalorder %s20, 0
      %p88 = por %p86, %p87
      %p89 = scmp.ne.s32.totalorder %s75, %s76
      %p90 = scmp.eq.s32.totalorder %s21, 3
      %p91 = por %p89, %p90
      %p93 = scmp.ne.s32.totalorder %s76, %s92
      %p94 = scmp.eq.s32.totalorder %s21, 0
      %p95 = por %p93, %p94
      %p96 = scmp.le.s32.totalorder 1, %s15
      %p97 = scmp.lt.s32.totalorder %s15, 5
      %p98 = pnand %p96, %p97
      %p99 = pneg %p98
      // Predicated region
      $region9: #{tpu_custom_call.1} parent=5 // pred_check
        _
      $region10: #{tpu_custom_call.1} parent=5 // pred_check_branch
        %101 = sbr.rel (%p98) target = $region12
      $region11: #{tpu_custom_call.1} parent=5 // pred_region
        %s102 = ssub.s32 %s15, 1
        // Predicated region
        $region13: #{tpu_custom_call.1} parent=11 // pred_check
          %p103 = pneg %p36
        $region14: #{tpu_custom_call.1} parent=11 // pred_check_branch
          %105 = sbr.rel (%p103) target = $region16
        $region15: #{tpu_custom_call.1} parent=11 // pred_region
          %s107 = ssub.s32 384, 384
          %108 = vsyncadd [#allocation3], %s107
          %s110 = sshll.u32 [#allocation2], 4
          %s111 = int_to_ptr.vmem [resolvable:$true] %s110
          %113 = dma.hbm_to_vmem [thread:$0]  %s0, 384, %s111, [#allocation3]
        $region16: #{tpu_custom_call.1} parent=11 // pred_fallthru
          _
      $region12: #{tpu_custom_call.1} parent=5 // pred_fallthru
        _
      %p114 = scmp.lt.s32.totalorder %s15, 4
      // Predicated region
      $region17: #{tpu_custom_call.1} parent=5 // pred_check
        %p115 = pneg %p114
      $region18: #{tpu_custom_call.1} parent=5 // pred_check_branch
        %117 = sbr.rel (%p115) target = $region20
      $region19: #{tpu_custom_call.1} parent=5 // pred_region
        // Predicated region
        $region21: #{tpu_custom_call.1} parent=19 // pred_check
          %p118 = pneg %p56
        $region22: #{tpu_custom_call.1} parent=19 // pred_check_branch
          %120 = sbr.rel (%p118) target = $region24
        $region23: #{tpu_custom_call.1} parent=19 // pred_region
          %s121 = sand.u32 %s46, 1
          %s122 = scalar_lea.sflag [#allocation6], %s121
          %s123 = sand.u32 %s46, 1
          %s124 = smul.addr %s123, 384
          %s125 = scalar_lea.vmem [#allocation5], %s124
          %s126 = smul.u32 16, %s15
          %s128 = ssub.s32 6144, 6144
          %129 = vsyncadd %s122, %s128
          %s130 = smul.addr %s126, 3
          %s131 = smul.addr %s130, 128
          %s132 = scalar_lea.hbm %s1, %s131
          %s133 = sshll.u32 %s125, 4
          %s134 = int_to_ptr.vmem [resolvable:$true] %s133
          %139 = dma.hbm_to_vmem [thread:$0]  %s132, 6144, %s134, %s122, 384, 384, 24
        $region24: #{tpu_custom_call.1} parent=19 // pred_fallthru
          _
      $region20: #{tpu_custom_call.1} parent=5 // pred_fallthru
        _
      %p140 = scmp.le.s32.totalorder 1, %s15
      %p141 = scmp.lt.s32.totalorder %s15, 5
      %p142 = pnand %p140, %p141
      %p143 = pneg %p142
      // Predicated region
      $region25: #{tpu_custom_call.1} parent=5 // pred_check
        _
      $region26: #{tpu_custom_call.1} parent=5 // pred_check_branch
        %145 = sbr.rel (%p142) target = $region28
      $region27: #{tpu_custom_call.1} parent=5 // pred_region
        %s146 = ssub.s32 %s15, 1
        // Predicated region
        $region29: #{tpu_custom_call.1} parent=27 // pred_check
          %p147 = pneg %p36
        $region30: #{tpu_custom_call.1} parent=27 // pred_check_branch
          %149 = sbr.rel (%p147) target = $region32
        $region31: #{tpu_custom_call.1} parent=27 // pred_region
          %150 = dma.done [#allocation3], 384
        $region32: #{tpu_custom_call.1} parent=27 // pred_fallthru
          _
        %s151 = sand.u32 %s49, 1
        %s152 = scalar_lea.sflag [#allocation6], %s151
        %s153 = sand.u32 %s49, 1
        %s154 = smul.addr %s153, 384
        %s155 = scalar_lea.vmem [#allocation5], %s154
        // Predicated region
        $region33: #{tpu_custom_call.1} parent=27 // pred_check
          %p156 = pneg %p62
        $region34: #{tpu_custom_call.1} parent=27 // pred_check_branch
          %158 = sbr.rel (%p156) target = $region36
        $region35: #{tpu_custom_call.1} parent=27 // pred_region
          %159 = dma.done %s152, 6144
        $region36: #{tpu_custom_call.1} parent=27 // pred_fallthru
          _
        %p160 = pneg %p36
        %p161 = pneg %p33
        %s162 = sand.u32 %s49, 1
        %s163 = scalar_lea.sflag [#allocation6], %s162
        %s164 = sand.u32 %s49, 1
        %s165 = smul.addr %s164, 384
        %s166 = scalar_lea.vmem [#allocation5], %s165
        %p167 = pneg %p62
        %p168 = pneg %p59
        %p169 = pneg %p88
        %p170 = pneg %p85
        %s171 = sand.u32 %s75, 1
        %s172 = scalar_lea.sflag [#allocation4], %s171
        %s173 = sand.u32 %s75, 1
        %s174 = smul.addr %s173, 384
        %s175 = scalar_lea.vmem [#allocation7], %s174
        %s176 = smul.u32 16, %s20
        %s177 = smul.u32 16, %s20
        %v178 = vld [vmem:[%s155] sm:$0xff]
        %v179 = vld [vmem:[%s155 + $0x8] sm:$0xff]
        %v180 = vld [vmem:[%s155 + $0x10] sm:$0xff]
        %v181 = vld [vmem:[%s155 + $0x18] sm:$0xff]
        %v182 = vld [vmem:[%s155 + $0x20] sm:$0xff]
        %v183 = vld [vmem:[%s155 + $0x28] sm:$0xff]
        %v184 = vld [vmem:[%s155 + $0x30] sm:$0xff]
        %v185 = vld [vmem:[%s155 + $0x38] sm:$0xff]
        %v186 = vld [vmem:[%s155 + $0x40] sm:$0xff]
        %v187 = vld [vmem:[%s155 + $0x48] sm:$0xff]
        %v188 = vld [vmem:[%s155 + $0x50] sm:$0xff]
        %v189 = vld [vmem:[%s155 + $0x58] sm:$0xff]
        %v190 = vld [vmem:[%s155 + $0x60] sm:$0xff]
        %v191 = vld [vmem:[%s155 + $0x68] sm:$0xff]
        %v192 = vld [vmem:[%s155 + $0x70] sm:$0xff]
        %v193 = vld [vmem:[%s155 + $0x78] sm:$0xff]
        %v194 = vld [vmem:[%s155 + $0x80] sm:$0xff]
        %v195 = vld [vmem:[%s155 + $0x88] sm:$0xff]
        %v196 = vld [vmem:[%s155 + $0x90] sm:$0xff]
        %v197 = vld [vmem:[%s155 + $0x98] sm:$0xff]
        %v198 = vld [vmem:[%s155 + $0xa0] sm:$0xff]
        %v199 = vld [vmem:[%s155 + $0xa8] sm:$0xff]
        %v200 = vld [vmem:[%s155 + $0xb0] sm:$0xff]
        %v201 = vld [vmem:[%s155 + $0xb8] sm:$0xff]
        %v202 = vld [vmem:[%s155 + $0xc0] sm:$0xff]
        %v203 = vld [vmem:[%s155 + $0xc8] sm:$0xff]
        %v204 = vld [vmem:[%s155 + $0xd0] sm:$0xff]
        %v205 = vld [vmem:[%s155 + $0xd8] sm:$0xff]
        %v206 = vld [vmem:[%s155 + $0xe0] sm:$0xff]
        %v207 = vld [vmem:[%s155 + $0xe8] sm:$0xff]
        %v208 = vld [vmem:[%s155 + $0xf0] sm:$0xff]
        %v209 = vld [vmem:[%s155 + $0xf8] sm:$0xff]
        %v210 = vld [vmem:[%s155 + $0x100] sm:$0xff]
        %v211 = vld [vmem:[%s155 + $0x108] sm:$0xff]
        %v212 = vld [vmem:[%s155 + $0x110] sm:$0xff]
        %v213 = vld [vmem:[%s155 + $0x118] sm:$0xff]
        %v214 = vld [vmem:[%s155 + $0x120] sm:$0xff]
        %v215 = vld [vmem:[%s155 + $0x128] sm:$0xff]
        %v216 = vld [vmem:[%s155 + $0x130] sm:$0xff]
        %v217 = vld [vmem:[%s155 + $0x138] sm:$0xff]
        %v218 = vld [vmem:[%s155 + $0x140] sm:$0xff]
        %v219 = vld [vmem:[%s155 + $0x148] sm:$0xff]
        %v220 = vld [vmem:[%s155 + $0x150] sm:$0xff]
        %v221 = vld [vmem:[%s155 + $0x158] sm:$0xff]
        %v222 = vld [vmem:[%s155 + $0x160] sm:$0xff]
        %v223 = vld [vmem:[%s155 + $0x168] sm:$0xff]
        %v224 = vld [vmem:[%s155 + $0x170] sm:$0xff]
        %v225 = vld [vmem:[%s155 + $0x178] sm:$0xff]
        %v226 = vld [vmem:[#allocation2] ss:$8 sm:$0x7]
        %s227 = scalar_lea.vmem [#allocation2], 1
        %v228 = vld [vmem:[%s227] ss:$8 sm:$0x7]
        %229 = vrot.lane.b32.xlu0 %v178, 2
        %v230 = vpop.permute.xlu0 %229
        %231 = vrot.lane.b32.xlu0 %v181, 2
        %v232 = vpop.permute.xlu0 %231
        %233 = vrot.lane.b32.xlu0 %v184, 2
        %v234 = vpop.permute.xlu0 %233
        %235 = vrot.lane.b32.xlu0 %v187, 2
        %v236 = vpop.permute.xlu0 %235
        %237 = vrot.lane.b32.xlu0 %v190, 2
        %v238 = vpop.permute.xlu0 %237
        %239 = vrot.lane.b32.xlu0 %v193, 2
        %v240 = vpop.permute.xlu0 %239
        %241 = vrot.lane.b32.xlu0 %v196, 2
        %v242 = vpop.permute.xlu0 %241
        %243 = vrot.lane.b32.xlu0 %v199, 2
        %v244 = vpop.permute.xlu0 %243
        %245 = vrot.lane.b32.xlu0 %v202, 2
        %v246 = vpop.permute.xlu0 %245
        %247 = vrot.lane.b32.xlu0 %v205, 2
        %v248 = vpop.permute.xlu0 %247
        %249 = vrot.lane.b32.xlu0 %v208, 2
        %v250 = vpop.permute.xlu0 %249
        %251 = vrot.lane.b32.xlu0 %v211, 2
        %v252 = vpop.permute.xlu0 %251
        %253 = vrot.lane.b32.xlu0 %v214, 2
        %v254 = vpop.permute.xlu0 %253
        %255 = vrot.lane.b32.xlu0 %v217, 2
        %v256 = vpop.permute.xlu0 %255
        %257 = vrot.lane.b32.xlu0 %v220, 2
        %v258 = vpop.permute.xlu0 %257
        %259 = vrot.lane.b32.xlu0 %v223, 2
        %v260 = vpop.permute.xlu0 %259
        %261 = vrot.lane.b32.xlu0 %v179, 2
        %v262 = vpop.permute.xlu0 %261
        %263 = vrot.lane.b32.xlu0 %v182, 2
        %v264 = vpop.permute.xlu0 %263
        %265 = vrot.lane.b32.xlu0 %v185, 2
        %v266 = vpop.permute.xlu0 %265
        %267 = vrot.lane.b32.xlu0 %v188, 2
        %v268 = vpop.permute.xlu0 %267
        %269 = vrot.lane.b32.xlu0 %v191, 2
        %v270 = vpop.permute.xlu0 %269
        %271 = vrot.lane.b32.xlu0 %v194, 2
        %v272 = vpop.permute.xlu0 %271
        %273 = vrot.lane.b32.xlu0 %v197, 2
        %v274 = vpop.permute.xlu0 %273
        %275 = vrot.lane.b32.xlu0 %v200, 2
        %v276 = vpop.permute.xlu0 %275
        %277 = vrot.lane.b32.xlu0 %v203, 2
        %v278 = vpop.permute.xlu0 %277
        %279 = vrot.lane.b32.xlu0 %v206, 2
        %v280 = vpop.permute.xlu0 %279
        %281 = vrot.lane.b32.xlu0 %v209, 2
        %v282 = vpop.permute.xlu0 %281
        %283 = vrot.lane.b32.xlu0 %v212, 2
        %v284 = vpop.permute.xlu0 %283
        %285 = vrot.lane.b32.xlu0 %v215, 2
        %v286 = vpop.permute.xlu0 %285
        %287 = vrot.lane.b32.xlu0 %v218, 2
        %v288 = vpop.permute.xlu0 %287
        %289 = vrot.lane.b32.xlu0 %v221, 2
        %v290 = vpop.permute.xlu0 %289
        %291 = vrot.lane.b32.xlu0 %v224, 2
        %v292 = vpop.permute.xlu0 %291
        %293 = vrot.lane.b32.xlu0 %v180, 2
        %v294 = vpop.permute.xlu0 %293
        %295 = vrot.lane.b32.xlu0 %v183, 2
        %v296 = vpop.permute.xlu0 %295
        %297 = vrot.lane.b32.xlu0 %v186, 2
        %v298 = vpop.permute.xlu0 %297
        %299 = vrot.lane.b32.xlu0 %v189, 2
        %v300 = vpop.permute.xlu0 %299
        %301 = vrot.lane.b32.xlu0 %v192, 2
        %v302 = vpop.permute.xlu0 %301
        %303 = vrot.lane.b32.xlu0 %v195, 2
        %v304 = vpop.permute.xlu0 %303
        %305 = vrot.lane.b32.xlu0 %v198, 2
        %v306 = vpop.permute.xlu0 %305
        %307 = vrot.lane.b32.xlu0 %v201, 2
        %v308 = vpop.permute.xlu0 %307
        %309 = vrot.lane.b32.xlu0 %v204, 2
        %v310 = vpop.permute.xlu0 %309
        %311 = vrot.lane.b32.xlu0 %v207, 2
        %v312 = vpop.permute.xlu0 %311
        %313 = vrot.lane.b32.xlu0 %v210, 2
        %v314 = vpop.permute.xlu0 %313
        %315 = vrot.lane.b32.xlu0 %v213, 2
        %v316 = vpop.permute.xlu0 %315
        %317 = vrot.lane.b32.xlu0 %v216, 2
        %v318 = vpop.permute.xlu0 %317
        %319 = vrot.lane.b32.xlu0 %v219, 2
        %v320 = vpop.permute.xlu0 %319
        %321 = vrot.lane.b32.xlu0 %v222, 2
        %v322 = vpop.permute.xlu0 %321
        %323 = vrot.lane.b32.xlu0 %v225, 2
        %v324 = vpop.permute.xlu0 %323
        %v325 = vlaneseq
        %v326 = vand.u32 %v325, 127
        %vm327 = vcmp.lt.s32.totalorder %v326, 2
        %v328 = vsel %vm327, %v262, %v294
        %v329 = vsel %vm327, %v264, %v296
        %v330 = vsel %vm327, %v266, %v298
        %v331 = vsel %vm327, %v268, %v300
        %v332 = vsel %vm327, %v270, %v302
        %v333 = vsel %vm327, %v272, %v304
        %v334 = vsel %vm327, %v274, %v306
        %v335 = vsel %vm327, %v276, %v308
        %v336 = vsel %vm327, %v278, %v310
        %v337 = vsel %vm327, %v280, %v312
        %v338 = vsel %vm327, %v282, %v314
        %v339 = vsel %vm327, %v284, %v316
        %v340 = vsel %vm327, %v286, %v318
        %v341 = vsel %vm327, %v288, %v320
        %v342 = vsel %vm327, %v290, %v322
        %v343 = vsel %vm327, %v292, %v324
        %v344 = vsel %vm327, %v230, %v262
        %v345 = vsel %vm327, %v232, %v264
        %v346 = vsel %vm327, %v234, %v266
        %v347 = vsel %vm327, %v236, %v268
        %v348 = vsel %vm327, %v238, %v270
        %v349 = vsel %vm327, %v240, %v272
        %v350 = vsel %vm327, %v242, %v274
        %v351 = vsel %vm327, %v244, %v276
        %v352 = vsel %vm327, %v246, %v278
        %v353 = vsel %vm327, %v248, %v280
        %v354 = vsel %vm327, %v250, %v282
        %v355 = vsel %vm327, %v252, %v284
        %v356 = vsel %vm327, %v254, %v286
        %v357 = vsel %vm327, %v256, %v288
        %v358 = vsel %vm327, %v258, %v290
        %v359 = vsel %vm327, %v260, %v292
        %v360 = vsel %vm327, %v294, %v230
        %v361 = vsel %vm327, %v296, %v232
        %v362 = vsel %vm327, %v298, %v234
        %v363 = vsel %vm327, %v300, %v236
        %v364 = vsel %vm327, %v302, %v238
        %v365 = vsel %vm327, %v304, %v240
        %v366 = vsel %vm327, %v306, %v242
        %v367 = vsel %vm327, %v308, %v244
        %v368 = vsel %vm327, %v310, %v246
        %v369 = vsel %vm327, %v312, %v248
        %v370 = vsel %vm327, %v314, %v250
        %v371 = vsel %vm327, %v316, %v252
        %v372 = vsel %vm327, %v318, %v254
        %v373 = vsel %vm327, %v320, %v256
        %v374 = vsel %vm327, %v322, %v258
        %v375 = vsel %vm327, %v324, %v260
        %v377 = vlaneseq
        %v378 = vshrl.u32 %v377, 7
        %v379 = vsub.s32 0, %v378
        %v380 = vrot.slane %v228, %v379
        %v381 = vlaneseq
        %v382 = vshrl.u32 %v381, 7
        %v383 = vsub.s32 1, %v382
        %v384 = vrot.slane %v228, %v383
        %v385 = vlaneseq
        %v386 = vshrl.u32 %v385, 7
        %v387 = vsub.s32 2, %v386
        %v388 = vrot.slane %v228, %v387
        %v392 = vmul.f32 %v380, %v360
        %v393 = vmul.f32 %v384, %v344
        %v394 = vmul.f32 %v388, %v328
        %v395 = vmul.f32 %v380, %v361
        %v396 = vmul.f32 %v384, %v345
        %v397 = vmul.f32 %v388, %v329
        %v398 = vmul.f32 %v380, %v362
        %v399 = vmul.f32 %v384, %v346
        %v400 = vmul.f32 %v388, %v330
        %v401 = vmul.f32 %v380, %v363
        %v402 = vmul.f32 %v384, %v347
        %v403 = vmul.f32 %v388, %v331
        %v404 = vmul.f32 %v380, %v364
        %v405 = vmul.f32 %v384, %v348
        %v406 = vmul.f32 %v388, %v332
        %v407 = vmul.f32 %v380, %v365
        %v408 = vmul.f32 %v384, %v349
        %v409 = vmul.f32 %v388, %v333
        %v410 = vmul.f32 %v380, %v366
        %v411 = vmul.f32 %v384, %v350
        %v412 = vmul.f32 %v388, %v334
        %v413 = vmul.f32 %v380, %v367
        %v414 = vmul.f32 %v384, %v351
        %v415 = vmul.f32 %v388, %v335
        %v416 = vmul.f32 %v380, %v368
        %v417 = vmul.f32 %v384, %v352
        %v418 = vmul.f32 %v388, %v336
        %v419 = vmul.f32 %v380, %v369
        %v420 = vmul.f32 %v384, %v353
        %v421 = vmul.f32 %v388, %v337
        %v422 = vmul.f32 %v380, %v370
        %v423 = vmul.f32 %v384, %v354
        %v424 = vmul.f32 %v388, %v338
        %v425 = vmul.f32 %v380, %v371
        %v426 = vmul.f32 %v384, %v355
        %v427 = vmul.f32 %v388, %v339
        %v428 = vmul.f32 %v380, %v372
        %v429 = vmul.f32 %v384, %v356
        %v430 = vmul.f32 %v388, %v340
        %v431 = vmul.f32 %v380, %v373
        %v432 = vmul.f32 %v384, %v357
        %v433 = vmul.f32 %v388, %v341
        %v434 = vmul.f32 %v380, %v374
        %v435 = vmul.f32 %v384, %v358
        %v436 = vmul.f32 %v388, %v342
        %v437 = vmul.f32 %v380, %v375
        %v438 = vmul.f32 %v384, %v359
        %v439 = vmul.f32 %v388, %v343
        %v441 = vlaneseq
        %v442 = vshrl.u32 %v441, 7
        %v443 = vsub.s32 0, %v442
        %v444 = vrot.slane %v226, %v443
        %v445 = vlaneseq
        %v446 = vshrl.u32 %v445, 7
        %v447 = vsub.s32 1, %v446
        %v448 = vrot.slane %v226, %v447
        %v449 = vlaneseq
        %v450 = vshrl.u32 %v449, 7
        %v451 = vsub.s32 2, %v450
        %v452 = vrot.slane %v226, %v451
        %v456 = vadd.f32 %v444, %v392
        %v457 = vadd.f32 %v448, %v393
        %v458 = vadd.f32 %v452, %v394
        %v459 = vadd.f32 %v444, %v395
        %v460 = vadd.f32 %v448, %v396
        %v461 = vadd.f32 %v452, %v397
        %v462 = vadd.f32 %v444, %v398
        %v463 = vadd.f32 %v448, %v399
        %v464 = vadd.f32 %v452, %v400
        %v465 = vadd.f32 %v444, %v401
        %v466 = vadd.f32 %v448, %v402
        %v467 = vadd.f32 %v452, %v403
        %v468 = vadd.f32 %v444, %v404
        %v469 = vadd.f32 %v448, %v405
        %v470 = vadd.f32 %v452, %v406
        %v471 = vadd.f32 %v444, %v407
        %v472 = vadd.f32 %v448, %v408
        %v473 = vadd.f32 %v452, %v409
        %v474 = vadd.f32 %v444, %v410
        %v475 = vadd.f32 %v448, %v411
        %v476 = vadd.f32 %v452, %v412
        %v477 = vadd.f32 %v444, %v413
        %v478 = vadd.f32 %v448, %v414
        %v479 = vadd.f32 %v452, %v415
        %v480 = vadd.f32 %v444, %v416
        %v481 = vadd.f32 %v448, %v417
        %v482 = vadd.f32 %v452, %v418
        %v483 = vadd.f32 %v444, %v419
        %v484 = vadd.f32 %v448, %v420
        %v485 = vadd.f32 %v452, %v421
        %v486 = vadd.f32 %v444, %v422
        %v487 = vadd.f32 %v448, %v423
        %v488 = vadd.f32 %v452, %v424
        %v489 = vadd.f32 %v444, %v425
        %v490 = vadd.f32 %v448, %v426
        %v491 = vadd.f32 %v452, %v427
        %v492 = vadd.f32 %v444, %v428
        %v493 = vadd.f32 %v448, %v429
        %v494 = vadd.f32 %v452, %v430
        %v495 = vadd.f32 %v444, %v431
        %v496 = vadd.f32 %v448, %v432
        %v497 = vadd.f32 %v452, %v433
        %v498 = vadd.f32 %v444, %v434
        %v499 = vadd.f32 %v448, %v435
        %v500 = vadd.f32 %v452, %v436
        %v501 = vadd.f32 %v444, %v437
        %v502 = vadd.f32 %v448, %v438
        %v503 = vadd.f32 %v452, %v439
        %s504 = scalar_lea.vmem [#allocation2], 2
        %v505 = vld [vmem:[%s504] ss:$8 sm:$0x7]
        %506 = vrot.lane.b32.xlu0 %v178, 1
        %v507 = vpop.permute.xlu0 %506
        %508 = vrot.lane.b32.xlu0 %v181, 1
        %v509 = vpop.permute.xlu0 %508
        %510 = vrot.lane.b32.xlu0 %v184, 1
        %v511 = vpop.permute.xlu0 %510
        %512 = vrot.lane.b32.xlu0 %v187, 1
        %v513 = vpop.permute.xlu0 %512
        %514 = vrot.lane.b32.xlu0 %v190, 1
        %v515 = vpop.permute.xlu0 %514
        %516 = vrot.lane.b32.xlu0 %v193, 1
        %v517 = vpop.permute.xlu0 %516
        %518 = vrot.lane.b32.xlu0 %v196, 1
        %v519 = vpop.permute.xlu0 %518
        %520 = vrot.lane.b32.xlu0 %v199, 1
        %v521 = vpop.permute.xlu0 %520
        %522 = vrot.lane.b32.xlu0 %v202, 1
        %v523 = vpop.permute.xlu0 %522
        %524 = vrot.lane.b32.xlu0 %v205, 1
        %v525 = vpop.permute.xlu0 %524
        %526 = vrot.lane.b32.xlu0 %v208, 1
        %v527 = vpop.permute.xlu0 %526
        %528 = vrot.lane.b32.xlu0 %v211, 1
        %v529 = vpop.permute.xlu0 %528
        %530 = vrot.lane.b32.xlu0 %v214, 1
        %v531 = vpop.permute.xlu0 %530
        %532 = vrot.lane.b32.xlu0 %v217, 1
        %v533 = vpop.permute.xlu0 %532
        %534 = vrot.lane.b32.xlu0 %v220, 1
        %v535 = vpop.permute.xlu0 %534
        %536 = vrot.lane.b32.xlu0 %v223, 1
        %v537 = vpop.permute.xlu0 %536
        %538 = vrot.lane.b32.xlu0 %v179, 1
        %v539 = vpop.permute.xlu0 %538
        %540 = vrot.lane.b32.xlu0 %v182, 1
        %v541 = vpop.permute.xlu0 %540
        %542 = vrot.lane.b32.xlu0 %v185, 1
        %v543 = vpop.permute.xlu0 %542
        %544 = vrot.lane.b32.xlu0 %v188, 1
        %v545 = vpop.permute.xlu0 %544
        %546 = vrot.lane.b32.xlu0 %v191, 1
        %v547 = vpop.permute.xlu0 %546
        %548 = vrot.lane.b32.xlu0 %v194, 1
        %v549 = vpop.permute.xlu0 %548
        %550 = vrot.lane.b32.xlu0 %v197, 1
        %v551 = vpop.permute.xlu0 %550
        %552 = vrot.lane.b32.xlu0 %v200, 1
        %v553 = vpop.permute.xlu0 %552
        %554 = vrot.lane.b32.xlu0 %v203, 1
        %v555 = vpop.permute.xlu0 %554
        %556 = vrot.lane.b32.xlu0 %v206, 1
        %v557 = vpop.permute.xlu0 %556
        %558 = vrot.lane.b32.xlu0 %v209, 1
        %v559 = vpop.permute.xlu0 %558
        %560 = vrot.lane.b32.xlu0 %v212, 1
        %v561 = vpop.permute.xlu0 %560
        %562 = vrot.lane.b32.xlu0 %v215, 1
        %v563 = vpop.permute.xlu0 %562
        %564 = vrot.lane.b32.xlu0 %v218, 1
        %v565 = vpop.permute.xlu0 %564
        %566 = vrot.lane.b32.xlu0 %v221, 1
        %v567 = vpop.permute.xlu0 %566
        %568 = vrot.lane.b32.xlu0 %v224, 1
        %v569 = vpop.permute.xlu0 %568
        %570 = vrot.lane.b32.xlu0 %v180, 1
        %v571 = vpop.permute.xlu0 %570
        %572 = vrot.lane.b32.xlu0 %v183, 1
        %v573 = vpop.permute.xlu0 %572
        %574 = vrot.lane.b32.xlu0 %v186, 1
        %v575 = vpop.permute.xlu0 %574
        %576 = vrot.lane.b32.xlu0 %v189, 1
        %v577 = vpop.permute.xlu0 %576
        %578 = vrot.lane.b32.xlu0 %v192, 1
        %v579 = vpop.permute.xlu0 %578
        %580 = vrot.lane.b32.xlu0 %v195, 1
        %v581 = vpop.permute.xlu0 %580
        %582 = vrot.lane.b32.xlu0 %v198, 1
        %v583 = vpop.permute.xlu0 %582
        %584 = vrot.lane.b32.xlu0 %v201, 1
        %v585 = vpop.permute.xlu0 %584
        %586 = vrot.lane.b32.xlu0 %v204, 1
        %v587 = vpop.permute.xlu0 %586
        %588 = vrot.lane.b32.xlu0 %v207, 1
        %v589 = vpop.permute.xlu0 %588
        %590 = vrot.lane.b32.xlu0 %v210, 1
        %v591 = vpop.permute.xlu0 %590
        %592 = vrot.lane.b32.xlu0 %v213, 1
        %v593 = vpop.permute.xlu0 %592
        %594 = vrot.lane.b32.xlu0 %v216, 1
        %v595 = vpop.permute.xlu0 %594
        %596 = vrot.lane.b32.xlu0 %v219, 1
        %v597 = vpop.permute.xlu0 %596
        %598 = vrot.lane.b32.xlu0 %v222, 1
        %v599 = vpop.permute.xlu0 %598
        %600 = vrot.lane.b32.xlu0 %v225, 1
        %v601 = vpop.permute.xlu0 %600
        %vm602 = vcmp.lt.s32.totalorder %v326, 1
        %v603 = vsel %vm602, %v539, %v571
        %v604 = vsel %vm602, %v541, %v573
        %v605 = vsel %vm602, %v543, %v575
        %v606 = vsel %vm602, %v545, %v577
        %v607 = vsel %vm602, %v547, %v579
        %v608 = vsel %vm602, %v549, %v581
        %v609 = vsel %vm602, %v551, %v583
        %v610 = vsel %vm602, %v553, %v585
        %v611 = vsel %vm602, %v555, %v587
        %v612 = vsel %vm602, %v557, %v589
        %v613 = vsel %vm602, %v559, %v591
        %v614 = vsel %vm602, %v561, %v593
        %v615 = vsel %vm602, %v563, %v595
        %v616 = vsel %vm602, %v565, %v597
        %v617 = vsel %vm602, %v567, %v599
        %v618 = vsel %vm602, %v569, %v601
        %v619 = vsel %vm602, %v507, %v539
        %v620 = vsel %vm602, %v509, %v541
        %v621 = vsel %vm602, %v511, %v543
        %v622 = vsel %vm602, %v513, %v545
        %v623 = vsel %vm602, %v515, %v547
        %v624 = vsel %vm602, %v517, %v549
        %v625 = vsel %vm602, %v519, %v551
        %v626 = vsel %vm602, %v521, %v553
        %v627 = vsel %vm602, %v523, %v555
        %v628 = vsel %vm602, %v525, %v557
        %v629 = vsel %vm602, %v527, %v559
        %v630 = vsel %vm602, %v529, %v561
        %v631 = vsel %vm602, %v531, %v563
        %v632 = vsel %vm602, %v533, %v565
        %v633 = vsel %vm602, %v535, %v567
        %v634 = vsel %vm602, %v537, %v569
        %v635 = vsel %vm602, %v571, %v507
        %v636 = vsel %vm602, %v573, %v509
        %v637 = vsel %vm602, %v575, %v511
        %v638 = vsel %vm602, %v577, %v513
        %v639 = vsel %vm602, %v579, %v515
        %v640 = vsel %vm602, %v581, %v517
        %v641 = vsel %vm602, %v583, %v519
        %v642 = vsel %vm602, %v585, %v521
        %v643 = vsel %vm602, %v587, %v523
        %v644 = vsel %vm602, %v589, %v525
        %v645 = vsel %vm602, %v591, %v527
        %v646 = vsel %vm602, %v593, %v529
        %v647 = vsel %vm602, %v595, %v531
        %v648 = vsel %vm602, %v597, %v533
        %v649 = vsel %vm602, %v599, %v535
        %v650 = vsel %vm602, %v601, %v537
        %v652 = vlaneseq
        %v653 = vshrl.u32 %v652, 7
        %v654 = vsub.s32 0, %v653
        %v655 = vrot.slane %v505, %v654
        %v656 = vlaneseq
        %v657 = vshrl.u32 %v656, 7
        %v658 = vsub.s32 1, %v657
        %v659 = vrot.slane %v505, %v658
        %v660 = vlaneseq
        %v661 = vshrl.u32 %v660, 7
        %v662 = vsub.s32 2, %v661
        %v663 = vrot.slane %v505, %v662
        %v667 = vmul.f32 %v655, %v635
        %v668 = vmul.f32 %v659, %v619
        %v669 = vmul.f32 %v663, %v603
        %v670 = vmul.f32 %v655, %v636
        %v671 = vmul.f32 %v659, %v620
        %v672 = vmul.f32 %v663, %v604
        %v673 = vmul.f32 %v655, %v637
        %v674 = vmul.f32 %v659, %v621
        %v675 = vmul.f32 %v663, %v605
        %v676 = vmul.f32 %v655, %v638
        %v677 = vmul.f32 %v659, %v622
        %v678 = vmul.f32 %v663, %v606
        %v679 = vmul.f32 %v655, %v639
        %v680 = vmul.f32 %v659, %v623
        %v681 = vmul.f32 %v663, %v607
        %v682 = vmul.f32 %v655, %v640
        %v683 = vmul.f32 %v659, %v624
        %v684 = vmul.f32 %v663, %v608
        %v685 = vmul.f32 %v655, %v641
        %v686 = vmul.f32 %v659, %v625
        %v687 = vmul.f32 %v663, %v609
        %v688 = vmul.f32 %v655, %v642
        %v689 = vmul.f32 %v659, %v626
        %v690 = vmul.f32 %v663, %v610
        %v691 = vmul.f32 %v655, %v643
        %v692 = vmul.f32 %v659, %v627
        %v693 = vmul.f32 %v663, %v611
        %v694 = vmul.f32 %v655, %v644
        %v695 = vmul.f32 %v659, %v628
        %v696 = vmul.f32 %v663, %v612
        %v697 = vmul.f32 %v655, %v645
        %v698 = vmul.f32 %v659, %v629
        %v699 = vmul.f32 %v663, %v613
        %v700 = vmul.f32 %v655, %v646
        %v701 = vmul.f32 %v659, %v630
        %v702 = vmul.f32 %v663, %v614
        %v703 = vmul.f32 %v655, %v647
        %v704 = vmul.f32 %v659, %v631
        %v705 = vmul.f32 %v663, %v615
        %v706 = vmul.f32 %v655, %v648
        %v707 = vmul.f32 %v659, %v632
        %v708 = vmul.f32 %v663, %v616
        %v709 = vmul.f32 %v655, %v649
        %v710 = vmul.f32 %v659, %v633
        %v711 = vmul.f32 %v663, %v617
        %v712 = vmul.f32 %v655, %v650
        %v713 = vmul.f32 %v659, %v634
        %v714 = vmul.f32 %v663, %v618
        %v715 = vadd.f32 %v456, %v667
        %v716 = vadd.f32 %v457, %v668
        %v717 = vadd.f32 %v458, %v669
        %v718 = vadd.f32 %v459, %v670
        %v719 = vadd.f32 %v460, %v671
        %v720 = vadd.f32 %v461, %v672
        %v721 = vadd.f32 %v462, %v673
        %v722 = vadd.f32 %v463, %v674
        %v723 = vadd.f32 %v464, %v675
        %v724 = vadd.f32 %v465, %v676
        %v725 = vadd.f32 %v466, %v677
        %v726 = vadd.f32 %v467, %v678
        %v727 = vadd.f32 %v468, %v679
        %v728 = vadd.f32 %v469, %v680
        %v729 = vadd.f32 %v470, %v681
        %v730 = vadd.f32 %v471, %v682
        %v731 = vadd.f32 %v472, %v683
        %v732 = vadd.f32 %v473, %v684
        %v733 = vadd.f32 %v474, %v685
        %v734 = vadd.f32 %v475, %v686
        %v735 = vadd.f32 %v476, %v687
        %v736 = vadd.f32 %v477, %v688
        %v737 = vadd.f32 %v478, %v689
        %v738 = vadd.f32 %v479, %v690
        %v739 = vadd.f32 %v480, %v691
        %v740 = vadd.f32 %v481, %v692
        %v741 = vadd.f32 %v482, %v693
        %v742 = vadd.f32 %v483, %v694
        %v743 = vadd.f32 %v484, %v695
        %v744 = vadd.f32 %v485, %v696
        %v745 = vadd.f32 %v486, %v697
        %v746 = vadd.f32 %v487, %v698
        %v747 = vadd.f32 %v488, %v699
        %v748 = vadd.f32 %v489, %v700
        %v749 = vadd.f32 %v490, %v701
        %v750 = vadd.f32 %v491, %v702
        %v751 = vadd.f32 %v492, %v703
        %v752 = vadd.f32 %v493, %v704
        %v753 = vadd.f32 %v494, %v705
        %v754 = vadd.f32 %v495, %v706
        %v755 = vadd.f32 %v496, %v707
        %v756 = vadd.f32 %v497, %v708
        %v757 = vadd.f32 %v498, %v709
        %v758 = vadd.f32 %v499, %v710
        %v759 = vadd.f32 %v500, %v711
        %v760 = vadd.f32 %v501, %v712
        %v761 = vadd.f32 %v502, %v713
        %v762 = vadd.f32 %v503, %v714
        %s763 = scalar_lea.vmem [#allocation2], 3
        %v764 = vld [vmem:[%s763] ss:$8 sm:$0x7]
        %v766 = vlaneseq
        %v767 = vshrl.u32 %v766, 7
        %v768 = vsub.s32 0, %v767
        %v769 = vrot.slane %v764, %v768
        %v770 = vlaneseq
        %v771 = vshrl.u32 %v770, 7
        %v772 = vsub.s32 1, %v771
        %v773 = vrot.slane %v764, %v772
        %v774 = vlaneseq
        %v775 = vshrl.u32 %v774, 7
        %v776 = vsub.s32 2, %v775
        %v777 = vrot.slane %v764, %v776
        %v781 = vmul.f32 %v769, %v178
        %v782 = vmul.f32 %v773, %v179
        %v783 = vmul.f32 %v777, %v180
        %v784 = vmul.f32 %v769, %v181
        %v785 = vmul.f32 %v773, %v182
        %v786 = vmul.f32 %v777, %v183
        %v787 = vmul.f32 %v769, %v184
        %v788 = vmul.f32 %v773, %v185
        %v789 = vmul.f32 %v777, %v186
        %v790 = vmul.f32 %v769, %v187
        %v791 = vmul.f32 %v773, %v188
        %v792 = vmul.f32 %v777, %v189
        %v793 = vmul.f32 %v769, %v190
        %v794 = vmul.f32 %v773, %v191
        %v795 = vmul.f32 %v777, %v192
        %v796 = vmul.f32 %v769, %v193
        %v797 = vmul.f32 %v773, %v194
        %v798 = vmul.f32 %v777, %v195
        %v799 = vmul.f32 %v769, %v196
        %v800 = vmul.f32 %v773, %v197
        %v801 = vmul.f32 %v777, %v198
        %v802 = vmul.f32 %v769, %v199
        %v803 = vmul.f32 %v773, %v200
        %v804 = vmul.f32 %v777, %v201
        %v805 = vmul.f32 %v769, %v202
        %v806 = vmul.f32 %v773, %v203
        %v807 = vmul.f32 %v777, %v204
        %v808 = vmul.f32 %v769, %v205
        %v809 = vmul.f32 %v773, %v206
        %v810 = vmul.f32 %v777, %v207
        %v811 = vmul.f32 %v769, %v208
        %v812 = vmul.f32 %v773, %v209
        %v813 = vmul.f32 %v777, %v210
        %v814 = vmul.f32 %v769, %v211
        %v815 = vmul.f32 %v773, %v212
        %v816 = vmul.f32 %v777, %v213
        %v817 = vmul.f32 %v769, %v214
        %v818 = vmul.f32 %v773, %v215
        %v819 = vmul.f32 %v777, %v216
        %v820 = vmul.f32 %v769, %v217
        %v821 = vmul.f32 %v773, %v218
        %v822 = vmul.f32 %v777, %v219
        %v823 = vmul.f32 %v769, %v220
        %v824 = vmul.f32 %v773, %v221
        %v825 = vmul.f32 %v777, %v222
        %v826 = vmul.f32 %v769, %v223
        %v827 = vmul.f32 %v773, %v224
        %v828 = vmul.f32 %v777, %v225
        %v829 = vadd.f32 %v715, %v781
        %v830 = vadd.f32 %v716, %v782
        %v831 = vadd.f32 %v717, %v783
        %v832 = vadd.f32 %v718, %v784
        %v833 = vadd.f32 %v719, %v785
        %v834 = vadd.f32 %v720, %v786
        %v835 = vadd.f32 %v721, %v787
        %v836 = vadd.f32 %v722, %v788
        %v837 = vadd.f32 %v723, %v789
        %v838 = vadd.f32 %v724, %v790
        %v839 = vadd.f32 %v725, %v791
        %v840 = vadd.f32 %v726, %v792
        %v841 = vadd.f32 %v727, %v793
        %v842 = vadd.f32 %v728, %v794
        %v843 = vadd.f32 %v729, %v795
        %v844 = vadd.f32 %v730, %v796
        %v845 = vadd.f32 %v731, %v797
        %v846 = vadd.f32 %v732, %v798
        %v847 = vadd.f32 %v733, %v799
        %v848 = vadd.f32 %v734, %v800
        %v849 = vadd.f32 %v735, %v801
        %v850 = vadd.f32 %v736, %v802
        %v851 = vadd.f32 %v737, %v803
        %v852 = vadd.f32 %v738, %v804
        %v853 = vadd.f32 %v739, %v805
        %v854 = vadd.f32 %v740, %v806
        %v855 = vadd.f32 %v741, %v807
        %v856 = vadd.f32 %v742, %v808
        %v857 = vadd.f32 %v743, %v809
        %v858 = vadd.f32 %v744, %v810
        %v859 = vadd.f32 %v745, %v811
        %v860 = vadd.f32 %v746, %v812
        %v861 = vadd.f32 %v747, %v813
        %v862 = vadd.f32 %v748, %v814
        %v863 = vadd.f32 %v749, %v815
        %v864 = vadd.f32 %v750, %v816
        %v865 = vadd.f32 %v751, %v817
        %v866 = vadd.f32 %v752, %v818
        %v867 = vadd.f32 %v753, %v819
        %v868 = vadd.f32 %v754, %v820
        %v869 = vadd.f32 %v755, %v821
        %v870 = vadd.f32 %v756, %v822
        %v871 = vadd.f32 %v757, %v823
        %v872 = vadd.f32 %v758, %v824
        %v873 = vadd.f32 %v759, %v825
        %v874 = vadd.f32 %v760, %v826
        %v875 = vadd.f32 %v761, %v827
        %v876 = vadd.f32 %v762, %v828
        %s877 = scalar_lea.vmem [#allocation2], 4
        %v878 = vld [vmem:[%s877] ss:$8 sm:$0x7]
        %879 = vrot.lane.b32.xlu0 %v178, 127
        %v880 = vpop.permute.xlu0 %879
        %881 = vrot.lane.b32.xlu0 %v181, 127
        %v882 = vpop.permute.xlu0 %881
        %883 = vrot.lane.b32.xlu0 %v184, 127
        %v884 = vpop.permute.xlu0 %883
        %885 = vrot.lane.b32.xlu0 %v187, 127
        %v886 = vpop.permute.xlu0 %885
        %887 = vrot.lane.b32.xlu0 %v190, 127
        %v888 = vpop.permute.xlu0 %887
        %889 = vrot.lane.b32.xlu0 %v193, 127
        %v890 = vpop.permute.xlu0 %889
        %891 = vrot.lane.b32.xlu0 %v196, 127
        %v892 = vpop.permute.xlu0 %891
        %893 = vrot.lane.b32.xlu0 %v199, 127
        %v894 = vpop.permute.xlu0 %893
        %895 = vrot.lane.b32.xlu0 %v202, 127
        %v896 = vpop.permute.xlu0 %895
        %897 = vrot.lane.b32.xlu0 %v205, 127
        %v898 = vpop.permute.xlu0 %897
        %899 = vrot.lane.b32.xlu0 %v208, 127
        %v900 = vpop.permute.xlu0 %899
        %901 = vrot.lane.b32.xlu0 %v211, 127
        %v902 = vpop.permute.xlu0 %901
        %903 = vrot.lane.b32.xlu0 %v214, 127
        %v904 = vpop.permute.xlu0 %903
        %905 = vrot.lane.b32.xlu0 %v217, 127
        %v906 = vpop.permute.xlu0 %905
        %907 = vrot.lane.b32.xlu0 %v220, 127
        %v908 = vpop.permute.xlu0 %907
        %909 = vrot.lane.b32.xlu0 %v223, 127
        %v910 = vpop.permute.xlu0 %909
        %911 = vrot.lane.b32.xlu0 %v179, 127
        %v912 = vpop.permute.xlu0 %911
        %913 = vrot.lane.b32.xlu0 %v182, 127
        %v914 = vpop.permute.xlu0 %913
        %915 = vrot.lane.b32.xlu0 %v185, 127
        %v916 = vpop.permute.xlu0 %915
        %917 = vrot.lane.b32.xlu0 %v188, 127
        %v918 = vpop.permute.xlu0 %917
        %919 = vrot.lane.b32.xlu0 %v191, 127
        %v920 = vpop.permute.xlu0 %919
        %921 = vrot.lane.b32.xlu0 %v194, 127
        %v922 = vpop.permute.xlu0 %921
        %923 = vrot.lane.b32.xlu0 %v197, 127
        %v924 = vpop.permute.xlu0 %923
        %925 = vrot.lane.b32.xlu0 %v200, 127
        %v926 = vpop.permute.xlu0 %925
        %927 = vrot.lane.b32.xlu0 %v203, 127
        %v928 = vpop.permute.xlu0 %927
        %929 = vrot.lane.b32.xlu0 %v206, 127
        %v930 = vpop.permute.xlu0 %929
        %931 = vrot.lane.b32.xlu0 %v209, 127
        %v932 = vpop.permute.xlu0 %931
        %933 = vrot.lane.b32.xlu0 %v212, 127
        %v934 = vpop.permute.xlu0 %933
        %935 = vrot.lane.b32.xlu0 %v215, 127
        %v936 = vpop.permute.xlu0 %935
        %937 = vrot.lane.b32.xlu0 %v218, 127
        %v938 = vpop.permute.xlu0 %937
        %939 = vrot.lane.b32.xlu0 %v221, 127
        %v940 = vpop.permute.xlu0 %939
        %941 = vrot.lane.b32.xlu0 %v224, 127
        %v942 = vpop.permute.xlu0 %941
        %943 = vrot.lane.b32.xlu0 %v180, 127
        %v944 = vpop.permute.xlu0 %943
        %945 = vrot.lane.b32.xlu0 %v183, 127
        %v946 = vpop.permute.xlu0 %945
        %947 = vrot.lane.b32.xlu0 %v186, 127
        %v948 = vpop.permute.xlu0 %947
        %949 = vrot.lane.b32.xlu0 %v189, 127
        %v950 = vpop.permute.xlu0 %949
        %951 = vrot.lane.b32.xlu0 %v192, 127
        %v952 = vpop.permute.xlu0 %951
        %953 = vrot.lane.b32.xlu0 %v195, 127
        %v954 = vpop.permute.xlu0 %953
        %955 = vrot.lane.b32.xlu0 %v198, 127
        %v956 = vpop.permute.xlu0 %955
        %957 = vrot.lane.b32.xlu0 %v201, 127
        %v958 = vpop.permute.xlu0 %957
        %959 = vrot.lane.b32.xlu0 %v204, 127
        %v960 = vpop.permute.xlu0 %959
        %961 = vrot.lane.b32.xlu0 %v207, 127
        %v962 = vpop.permute.xlu0 %961
        %963 = vrot.lane.b32.xlu0 %v210, 127
        %v964 = vpop.permute.xlu0 %963
        %965 = vrot.lane.b32.xlu0 %v213, 127
        %v966 = vpop.permute.xlu0 %965
        %967 = vrot.lane.b32.xlu0 %v216, 127
        %v968 = vpop.permute.xlu0 %967
        %969 = vrot.lane.b32.xlu0 %v219, 127
        %v970 = vpop.permute.xlu0 %969
        %971 = vrot.lane.b32.xlu0 %v222, 127
        %v972 = vpop.permute.xlu0 %971
        %973 = vrot.lane.b32.xlu0 %v225, 127
        %v974 = vpop.permute.xlu0 %973
        %vm975 = vcmp.lt.s32.totalorder %v326, 127
        %v976 = vsel %vm975, %v912, %v944
        %v977 = vsel %vm975, %v914, %v946
        %v978 = vsel %vm975, %v916, %v948
        %v979 = vsel %vm975, %v918, %v950
        %v980 = vsel %vm975, %v920, %v952
        %v981 = vsel %vm975, %v922, %v954
        %v982 = vsel %vm975, %v924, %v956
        %v983 = vsel %vm975, %v926, %v958
        %v984 = vsel %vm975, %v928, %v960
        %v985 = vsel %vm975, %v930, %v962
        %v986 = vsel %vm975, %v932, %v964
        %v987 = vsel %vm975, %v934, %v966
        %v988 = vsel %vm975, %v936, %v968
        %v989 = vsel %vm975, %v938, %v970
        %v990 = vsel %vm975, %v940, %v972
        %v991 = vsel %vm975, %v942, %v974
        %v992 = vsel %vm975, %v880, %v912
        %v993 = vsel %vm975, %v882, %v914
        %v994 = vsel %vm975, %v884, %v916
        %v995 = vsel %vm975, %v886, %v918
        %v996 = vsel %vm975, %v888, %v920
        %v997 = vsel %vm975, %v890, %v922
        %v998 = vsel %vm975, %v892, %v924
        %v999 = vsel %vm975, %v894, %v926
        %v1000 = vsel %vm975, %v896, %v928
        %v1001 = vsel %vm975, %v898, %v930
        %v1002 = vsel %vm975, %v900, %v932
        %v1003 = vsel %vm975, %v902, %v934
        %v1004 = vsel %vm975, %v904, %v936
        %v1005 = vsel %vm975, %v906, %v938
        %v1006 = vsel %vm975, %v908, %v940
        %v1007 = vsel %vm975, %v910, %v942
        %v1008 = vsel %vm975, %v944, %v880
        %v1009 = vsel %vm975, %v946, %v882
        %v1010 = vsel %vm975, %v948, %v884
        %v1011 = vsel %vm975, %v950, %v886
        %v1012 = vsel %vm975, %v952, %v888
        %v1013 = vsel %vm975, %v954, %v890
        %v1014 = vsel %vm975, %v956, %v892
        %v1015 = vsel %vm975, %v958, %v894
        %v1016 = vsel %vm975, %v960, %v896
        %v1017 = vsel %vm975, %v962, %v898
        %v1018 = vsel %vm975, %v964, %v900
        %v1019 = vsel %vm975, %v966, %v902
        %v1020 = vsel %vm975, %v968, %v904
        %v1021 = vsel %vm975, %v970, %v906
        %v1022 = vsel %vm975, %v972, %v908
        %v1023 = vsel %vm975, %v974, %v910
        %v1025 = vlaneseq
        %v1026 = vshrl.u32 %v1025, 7
        %v1027 = vsub.s32 0, %v1026
        %v1028 = vrot.slane %v878, %v1027
        %v1029 = vlaneseq
        %v1030 = vshrl.u32 %v1029, 7
        %v1031 = vsub.s32 1, %v1030
        %v1032 = vrot.slane %v878, %v1031
        %v1033 = vlaneseq
        %v1034 = vshrl.u32 %v1033, 7
        %v1035 = vsub.s32 2, %v1034
        %v1036 = vrot.slane %v878, %v1035
        %v1040 = vmul.f32 %v1028, %v992
        %v1041 = vmul.f32 %v1032, %v976
        %v1042 = vmul.f32 %v1036, %v1008
        %v1043 = vmul.f32 %v1028, %v993
        %v1044 = vmul.f32 %v1032, %v977
        %v1045 = vmul.f32 %v1036, %v1009
        %v1046 = vmul.f32 %v1028, %v994
        %v1047 = vmul.f32 %v1032, %v978
        %v1048 = vmul.f32 %v1036, %v1010
        %v1049 = vmul.f32 %v1028, %v995
        %v1050 = vmul.f32 %v1032, %v979
        %v1051 = vmul.f32 %v1036, %v1011
        %v1052 = vmul.f32 %v1028, %v996
        %v1053 = vmul.f32 %v1032, %v980
        %v1054 = vmul.f32 %v1036, %v1012
        %v1055 = vmul.f32 %v1028, %v997
        %v1056 = vmul.f32 %v1032, %v981
        %v1057 = vmul.f32 %v1036, %v1013
        %v1058 = vmul.f32 %v1028, %v998
        %v1059 = vmul.f32 %v1032, %v982
        %v1060 = vmul.f32 %v1036, %v1014
        %v1061 = vmul.f32 %v1028, %v999
        %v1062 = vmul.f32 %v1032, %v983
        %v1063 = vmul.f32 %v1036, %v1015
        %v1064 = vmul.f32 %v1028, %v1000
        %v1065 = vmul.f32 %v1032, %v984
        %v1066 = vmul.f32 %v1036, %v1016
        %v1067 = vmul.f32 %v1028, %v1001
        %v1068 = vmul.f32 %v1032, %v985
        %v1069 = vmul.f32 %v1036, %v1017
        %v1070 = vmul.f32 %v1028, %v1002
        %v1071 = vmul.f32 %v1032, %v986
        %v1072 = vmul.f32 %v1036, %v1018
        %v1073 = vmul.f32 %v1028, %v1003
        %v1074 = vmul.f32 %v1032, %v987
        %v1075 = vmul.f32 %v1036, %v1019
        %v1076 = vmul.f32 %v1028, %v1004
        %v1077 = vmul.f32 %v1032, %v988
        %v1078 = vmul.f32 %v1036, %v1020
        %v1079 = vmul.f32 %v1028, %v1005
        %v1080 = vmul.f32 %v1032, %v989
        %v1081 = vmul.f32 %v1036, %v1021
        %v1082 = vmul.f32 %v1028, %v1006
        %v1083 = vmul.f32 %v1032, %v990
        %v1084 = vmul.f32 %v1036, %v1022
        %v1085 = vmul.f32 %v1028, %v1007
        %v1086 = vmul.f32 %v1032, %v991
        %v1087 = vmul.f32 %v1036, %v1023
        %v1088 = vadd.f32 %v829, %v1040
        %v1089 = vadd.f32 %v830, %v1041
        %v1090 = vadd.f32 %v831, %v1042
        %v1091 = vadd.f32 %v832, %v1043
        %v1092 = vadd.f32 %v833, %v1044
        %v1093 = vadd.f32 %v834, %v1045
        %v1094 = vadd.f32 %v835, %v1046
        %v1095 = vadd.f32 %v836, %v1047
        %v1096 = vadd.f32 %v837, %v1048
        %v1097 = vadd.f32 %v838, %v1049
        %v1098 = vadd.f32 %v839, %v1050
        %v1099 = vadd.f32 %v840, %v1051
        %v1100 = vadd.f32 %v841, %v1052
        %v1101 = vadd.f32 %v842, %v1053
        %v1102 = vadd.f32 %v843, %v1054
        %v1103 = vadd.f32 %v844, %v1055
        %v1104 = vadd.f32 %v845, %v1056
        %v1105 = vadd.f32 %v846, %v1057
        %v1106 = vadd.f32 %v847, %v1058
        %v1107 = vadd.f32 %v848, %v1059
        %v1108 = vadd.f32 %v849, %v1060
        %v1109 = vadd.f32 %v850, %v1061
        %v1110 = vadd.f32 %v851, %v1062
        %v1111 = vadd.f32 %v852, %v1063
        %v1112 = vadd.f32 %v853, %v1064
        %v1113 = vadd.f32 %v854, %v1065
        %v1114 = vadd.f32 %v855, %v1066
        %v1115 = vadd.f32 %v856, %v1067
        %v1116 = vadd.f32 %v857, %v1068
        %v1117 = vadd.f32 %v858, %v1069
        %v1118 = vadd.f32 %v859, %v1070
        %v1119 = vadd.f32 %v860, %v1071
        %v1120 = vadd.f32 %v861, %v1072
        %v1121 = vadd.f32 %v862, %v1073
        %v1122 = vadd.f32 %v863, %v1074
        %v1123 = vadd.f32 %v864, %v1075
        %v1124 = vadd.f32 %v865, %v1076
        %v1125 = vadd.f32 %v866, %v1077
        %v1126 = vadd.f32 %v867, %v1078
        %v1127 = vadd.f32 %v868, %v1079
        %v1128 = vadd.f32 %v869, %v1080
        %v1129 = vadd.f32 %v870, %v1081
        %v1130 = vadd.f32 %v871, %v1082
        %v1131 = vadd.f32 %v872, %v1083
        %v1132 = vadd.f32 %v873, %v1084
        %v1133 = vadd.f32 %v874, %v1085
        %v1134 = vadd.f32 %v875, %v1086
        %v1135 = vadd.f32 %v876, %v1087
        %s1136 = scalar_lea.vmem [#allocation2], 5
        %v1137 = vld [vmem:[%s1136] ss:$8 sm:$0x7]
        %1138 = vrot.lane.b32.xlu0 %v178, 126
        %v1139 = vpop.permute.xlu0 %1138
        %1140 = vrot.lane.b32.xlu0 %v181, 126
        %v1141 = vpop.permute.xlu0 %1140
        %1142 = vrot.lane.b32.xlu0 %v184, 126
        %v1143 = vpop.permute.xlu0 %1142
        %1144 = vrot.lane.b32.xlu0 %v187, 126
        %v1145 = vpop.permute.xlu0 %1144
        %1146 = vrot.lane.b32.xlu0 %v190, 126
        %v1147 = vpop.permute.xlu0 %1146
        %1148 = vrot.lane.b32.xlu0 %v193, 126
        %v1149 = vpop.permute.xlu0 %1148
        %1150 = vrot.lane.b32.xlu0 %v196, 126
        %v1151 = vpop.permute.xlu0 %1150
        %1152 = vrot.lane.b32.xlu0 %v199, 126
        %v1153 = vpop.permute.xlu0 %1152
        %1154 = vrot.lane.b32.xlu0 %v202, 126
        %v1155 = vpop.permute.xlu0 %1154
        %1156 = vrot.lane.b32.xlu0 %v205, 126
        %v1157 = vpop.permute.xlu0 %1156
        %1158 = vrot.lane.b32.xlu0 %v208, 126
        %v1159 = vpop.permute.xlu0 %1158
        %1160 = vrot.lane.b32.xlu0 %v211, 126
        %v1161 = vpop.permute.xlu0 %1160
        %1162 = vrot.lane.b32.xlu0 %v214, 126
        %v1163 = vpop.permute.xlu0 %1162
        %1164 = vrot.lane.b32.xlu0 %v217, 126
        %v1165 = vpop.permute.xlu0 %1164
        %1166 = vrot.lane.b32.xlu0 %v220, 126
        %v1167 = vpop.permute.xlu0 %1166
        %1168 = vrot.lane.b32.xlu0 %v223, 126
        %v1169 = vpop.permute.xlu0 %1168
        %1170 = vrot.lane.b32.xlu0 %v179, 126
        %v1171 = vpop.permute.xlu0 %1170
        %1172 = vrot.lane.b32.xlu0 %v182, 126
        %v1173 = vpop.permute.xlu0 %1172
        %1174 = vrot.lane.b32.xlu0 %v185, 126
        %v1175 = vpop.permute.xlu0 %1174
        %1176 = vrot.lane.b32.xlu0 %v188, 126
        %v1177 = vpop.permute.xlu0 %1176
        %1178 = vrot.lane.b32.xlu0 %v191, 126
        %v1179 = vpop.permute.xlu0 %1178
        %1180 = vrot.lane.b32.xlu0 %v194, 126
        %v1181 = vpop.permute.xlu0 %1180
        %1182 = vrot.lane.b32.xlu0 %v197, 126
        %v1183 = vpop.permute.xlu0 %1182
        %1184 = vrot.lane.b32.xlu0 %v200, 126
        %v1185 = vpop.permute.xlu0 %1184
        %1186 = vrot.lane.b32.xlu0 %v203, 126
        %v1187 = vpop.permute.xlu0 %1186
        %1188 = vrot.lane.b32.xlu0 %v206, 126
        %v1189 = vpop.permute.xlu0 %1188
        %1190 = vrot.lane.b32.xlu0 %v209, 126
        %v1191 = vpop.permute.xlu0 %1190
        %1192 = vrot.lane.b32.xlu0 %v212, 126
        %v1193 = vpop.permute.xlu0 %1192
        %1194 = vrot.lane.b32.xlu0 %v215, 126
        %v1195 = vpop.permute.xlu0 %1194
        %1196 = vrot.lane.b32.xlu0 %v218, 126
        %v1197 = vpop.permute.xlu0 %1196
        %1198 = vrot.lane.b32.xlu0 %v221, 126
        %v1199 = vpop.permute.xlu0 %1198
        %1200 = vrot.lane.b32.xlu0 %v224, 126
        %v1201 = vpop.permute.xlu0 %1200
        %1202 = vrot.lane.b32.xlu0 %v180, 126
        %v1203 = vpop.permute.xlu0 %1202
        %1204 = vrot.lane.b32.xlu0 %v183, 126
        %v1205 = vpop.permute.xlu0 %1204
        %1206 = vrot.lane.b32.xlu0 %v186, 126
        %v1207 = vpop.permute.xlu0 %1206
        %1208 = vrot.lane.b32.xlu0 %v189, 126
        %v1209 = vpop.permute.xlu0 %1208
        %1210 = vrot.lane.b32.xlu0 %v192, 126
        %v1211 = vpop.permute.xlu0 %1210
        %1212 = vrot.lane.b32.xlu0 %v195, 126
        %v1213 = vpop.permute.xlu0 %1212
        %1214 = vrot.lane.b32.xlu0 %v198, 126
        %v1215 = vpop.permute.xlu0 %1214
        %1216 = vrot.lane.b32.xlu0 %v201, 126
        %v1217 = vpop.permute.xlu0 %1216
        %1218 = vrot.lane.b32.xlu0 %v204, 126
        %v1219 = vpop.permute.xlu0 %1218
        %1220 = vrot.lane.b32.xlu0 %v207, 126
        %v1221 = vpop.permute.xlu0 %1220
        %1222 = vrot.lane.b32.xlu0 %v210, 126
        %v1223 = vpop.permute.xlu0 %1222
        %1224 = vrot.lane.b32.xlu0 %v213, 126
        %v1225 = vpop.permute.xlu0 %1224
        %1226 = vrot.lane.b32.xlu0 %v216, 126
        %v1227 = vpop.permute.xlu0 %1226
        %1228 = vrot.lane.b32.xlu0 %v219, 126
        %v1229 = vpop.permute.xlu0 %1228
        %1230 = vrot.lane.b32.xlu0 %v222, 126
        %v1231 = vpop.permute.xlu0 %1230
        %1232 = vrot.lane.b32.xlu0 %v225, 126
        %v1233 = vpop.permute.xlu0 %1232
        %vm1234 = vcmp.lt.s32.totalorder %v326, 126
        %v1235 = vsel %vm1234, %v1171, %v1203
        %v1236 = vsel %vm1234, %v1173, %v1205
        %v1237 = vsel %vm1234, %v1175, %v1207
        %v1238 = vsel %vm1234, %v1177, %v1209
        %v1239 = vsel %vm1234, %v1179, %v1211
        %v1240 = vsel %vm1234, %v1181, %v1213
        %v1241 = vsel %vm1234, %v1183, %v1215
        %v1242 = vsel %vm1234, %v1185, %v1217
        %v1243 = vsel %vm1234, %v1187, %v1219
        %v1244 = vsel %vm1234, %v1189, %v1221
        %v1245 = vsel %vm1234, %v1191, %v1223
        %v1246 = vsel %vm1234, %v1193, %v1225
        %v1247 = vsel %vm1234, %v1195, %v1227
        %v1248 = vsel %vm1234, %v1197, %v1229
        %v1249 = vsel %vm1234, %v1199, %v1231
        %v1250 = vsel %vm1234, %v1201, %v1233
        %v1251 = vsel %vm1234, %v1139, %v1171
        %v1252 = vsel %vm1234, %v1141, %v1173
        %v1253 = vsel %vm1234, %v1143, %v1175
        %v1254 = vsel %vm1234, %v1145, %v1177
        %v1255 = vsel %vm1234, %v1147, %v1179
        %v1256 = vsel %vm1234, %v1149, %v1181
        %v1257 = vsel %vm1234, %v1151, %v1183
        %v1258 = vsel %vm1234, %v1153, %v1185
        %v1259 = vsel %vm1234, %v1155, %v1187
        %v1260 = vsel %vm1234, %v1157, %v1189
        %v1261 = vsel %vm1234, %v1159, %v1191
        %v1262 = vsel %vm1234, %v1161, %v1193
        %v1263 = vsel %vm1234, %v1163, %v1195
        %v1264 = vsel %vm1234, %v1165, %v1197
        %v1265 = vsel %vm1234, %v1167, %v1199
        %v1266 = vsel %vm1234, %v1169, %v1201
        %v1267 = vsel %vm1234, %v1203, %v1139
        %v1268 = vsel %vm1234, %v1205, %v1141
        %v1269 = vsel %vm1234, %v1207, %v1143
        %v1270 = vsel %vm1234, %v1209, %v1145
        %v1271 = vsel %vm1234, %v1211, %v1147
        %v1272 = vsel %vm1234, %v1213, %v1149
        %v1273 = vsel %vm1234, %v1215, %v1151
        %v1274 = vsel %vm1234, %v1217, %v1153
        %v1275 = vsel %vm1234, %v1219, %v1155
        %v1276 = vsel %vm1234, %v1221, %v1157
        %v1277 = vsel %vm1234, %v1223, %v1159
        %v1278 = vsel %vm1234, %v1225, %v1161
        %v1279 = vsel %vm1234, %v1227, %v1163
        %v1280 = vsel %vm1234, %v1229, %v1165
        %v1281 = vsel %vm1234, %v1231, %v1167
        %v1282 = vsel %vm1234, %v1233, %v1169
        %v1284 = vlaneseq
        %v1285 = vshrl.u32 %v1284, 7
        %v1286 = vsub.s32 0, %v1285
        %v1287 = vrot.slane %v1137, %v1286
        %v1288 = vlaneseq
        %v1289 = vshrl.u32 %v1288, 7
        %v1290 = vsub.s32 1, %v1289
        %v1291 = vrot.slane %v1137, %v1290
        %v1292 = vlaneseq
        %v1293 = vshrl.u32 %v1292, 7
        %v1294 = vsub.s32 2, %v1293
        %v1295 = vrot.slane %v1137, %v1294
        %v1299 = vmul.f32 %v1287, %v1251
        %v1300 = vmul.f32 %v1291, %v1235
        %v1301 = vmul.f32 %v1295, %v1267
        %v1302 = vmul.f32 %v1287, %v1252
        %v1303 = vmul.f32 %v1291, %v1236
        %v1304 = vmul.f32 %v1295, %v1268
        %v1305 = vmul.f32 %v1287, %v1253
        %v1306 = vmul.f32 %v1291, %v1237
        %v1307 = vmul.f32 %v1295, %v1269
        %v1308 = vmul.f32 %v1287, %v1254
        %v1309 = vmul.f32 %v1291, %v1238
        %v1310 = vmul.f32 %v1295, %v1270
        %v1311 = vmul.f32 %v1287, %v1255
        %v1312 = vmul.f32 %v1291, %v1239
        %v1313 = vmul.f32 %v1295, %v1271
        %v1314 = vmul.f32 %v1287, %v1256
        %v1315 = vmul.f32 %v1291, %v1240
        %v1316 = vmul.f32 %v1295, %v1272
        %v1317 = vmul.f32 %v1287, %v1257
        %v1318 = vmul.f32 %v1291, %v1241
        %v1319 = vmul.f32 %v1295, %v1273
        %v1320 = vmul.f32 %v1287, %v1258
        %v1321 = vmul.f32 %v1291, %v1242
        %v1322 = vmul.f32 %v1295, %v1274
        %v1323 = vmul.f32 %v1287, %v1259
        %v1324 = vmul.f32 %v1291, %v1243
        %v1325 = vmul.f32 %v1295, %v1275
        %v1326 = vmul.f32 %v1287, %v1260
        %v1327 = vmul.f32 %v1291, %v1244
        %v1328 = vmul.f32 %v1295, %v1276
        %v1329 = vmul.f32 %v1287, %v1261
        %v1330 = vmul.f32 %v1291, %v1245
        %v1331 = vmul.f32 %v1295, %v1277
        %v1332 = vmul.f32 %v1287, %v1262
        %v1333 = vmul.f32 %v1291, %v1246
        %v1334 = vmul.f32 %v1295, %v1278
        %v1335 = vmul.f32 %v1287, %v1263
        %v1336 = vmul.f32 %v1291, %v1247
        %v1337 = vmul.f32 %v1295, %v1279
        %v1338 = vmul.f32 %v1287, %v1264
        %v1339 = vmul.f32 %v1291, %v1248
        %v1340 = vmul.f32 %v1295, %v1280
        %v1341 = vmul.f32 %v1287, %v1265
        %v1342 = vmul.f32 %v1291, %v1249
        %v1343 = vmul.f32 %v1295, %v1281
        %v1344 = vmul.f32 %v1287, %v1266
        %v1345 = vmul.f32 %v1291, %v1250
        %v1346 = vmul.f32 %v1295, %v1282
        %v1347 = vadd.f32 %v1088, %v1299
        %v1348 = vadd.f32 %v1089, %v1300
        %v1349 = vadd.f32 %v1090, %v1301
        %v1350 = vadd.f32 %v1091, %v1302
        %v1351 = vadd.f32 %v1092, %v1303
        %v1352 = vadd.f32 %v1093, %v1304
        %v1353 = vadd.f32 %v1094, %v1305
        %v1354 = vadd.f32 %v1095, %v1306
        %v1355 = vadd.f32 %v1096, %v1307
        %v1356 = vadd.f32 %v1097, %v1308
        %v1357 = vadd.f32 %v1098, %v1309
        %v1358 = vadd.f32 %v1099, %v1310
        %v1359 = vadd.f32 %v1100, %v1311
        %v1360 = vadd.f32 %v1101, %v1312
        %v1361 = vadd.f32 %v1102, %v1313
        %v1362 = vadd.f32 %v1103, %v1314
        %v1363 = vadd.f32 %v1104, %v1315
        %v1364 = vadd.f32 %v1105, %v1316
        %v1365 = vadd.f32 %v1106, %v1317
        %v1366 = vadd.f32 %v1107, %v1318
        %v1367 = vadd.f32 %v1108, %v1319
        %v1368 = vadd.f32 %v1109, %v1320
        %v1369 = vadd.f32 %v1110, %v1321
        %v1370 = vadd.f32 %v1111, %v1322
        %v1371 = vadd.f32 %v1112, %v1323
        %v1372 = vadd.f32 %v1113, %v1324
        %v1373 = vadd.f32 %v1114, %v1325
        %v1374 = vadd.f32 %v1115, %v1326
        %v1375 = vadd.f32 %v1116, %v1327
        %v1376 = vadd.f32 %v1117, %v1328
        %v1377 = vadd.f32 %v1118, %v1329
        %v1378 = vadd.f32 %v1119, %v1330
        %v1379 = vadd.f32 %v1120, %v1331
        %v1380 = vadd.f32 %v1121, %v1332
        %v1381 = vadd.f32 %v1122, %v1333
        %v1382 = vadd.f32 %v1123, %v1334
        %v1383 = vadd.f32 %v1124, %v1335
        %v1384 = vadd.f32 %v1125, %v1336
        %v1385 = vadd.f32 %v1126, %v1337
        %v1386 = vadd.f32 %v1127, %v1338
        %v1387 = vadd.f32 %v1128, %v1339
        %v1388 = vadd.f32 %v1129, %v1340
        %v1389 = vadd.f32 %v1130, %v1341
        %v1390 = vadd.f32 %v1131, %v1342
        %v1391 = vadd.f32 %v1132, %v1343
        %v1392 = vadd.f32 %v1133, %v1344
        %v1393 = vadd.f32 %v1134, %v1345
        %v1394 = vadd.f32 %v1135, %v1346
        %1395 = vst [vmem:[%s175] sm:$0xff] %v1347
        %1396 = vst [vmem:[%s175 + $0x8] sm:$0xff] %v1348
        %1397 = vst [vmem:[%s175 + $0x10] sm:$0xff] %v1349
        %1398 = vst [vmem:[%s175 + $0x18] sm:$0xff] %v1350
        %1399 = vst [vmem:[%s175 + $0x20] sm:$0xff] %v1351
        %1400 = vst [vmem:[%s175 + $0x28] sm:$0xff] %v1352
        %1401 = vst [vmem:[%s175 + $0x30] sm:$0xff] %v1353
        %1402 = vst [vmem:[%s175 + $0x38] sm:$0xff] %v1354
        %1403 = vst [vmem:[%s175 + $0x40] sm:$0xff] %v1355
        %1404 = vst [vmem:[%s175 + $0x48] sm:$0xff] %v1356
        %1405 = vst [vmem:[%s175 + $0x50] sm:$0xff] %v1357
        %1406 = vst [vmem:[%s175 + $0x58] sm:$0xff] %v1358
        %1407 = vst [vmem:[%s175 + $0x60] sm:$0xff] %v1359
        %1408 = vst [vmem:[%s175 + $0x68] sm:$0xff] %v1360
        %1409 = vst [vmem:[%s175 + $0x70] sm:$0xff] %v1361
        %1410 = vst [vmem:[%s175 + $0x78] sm:$0xff] %v1362
        %1411 = vst [vmem:[%s175 + $0x80] sm:$0xff] %v1363
        %1412 = vst [vmem:[%s175 + $0x88] sm:$0xff] %v1364
        %1413 = vst [vmem:[%s175 + $0x90] sm:$0xff] %v1365
        %1414 = vst [vmem:[%s175 + $0x98] sm:$0xff] %v1366
        %1415 = vst [vmem:[%s175 + $0xa0] sm:$0xff] %v1367
        %1416 = vst [vmem:[%s175 + $0xa8] sm:$0xff] %v1368
        %1417 = vst [vmem:[%s175 + $0xb0] sm:$0xff] %v1369
        %1418 = vst [vmem:[%s175 + $0xb8] sm:$0xff] %v1370
        %1419 = vst [vmem:[%s175 + $0xc0] sm:$0xff] %v1371
        %1420 = vst [vmem:[%s175 + $0xc8] sm:$0xff] %v1372
        %1421 = vst [vmem:[%s175 + $0xd0] sm:$0xff] %v1373
        %1422 = vst [vmem:[%s175 + $0xd8] sm:$0xff] %v1374
        %1423 = vst [vmem:[%s175 + $0xe0] sm:$0xff] %v1375
        %1424 = vst [vmem:[%s175 + $0xe8] sm:$0xff] %v1376
        %1425 = vst [vmem:[%s175 + $0xf0] sm:$0xff] %v1377
        %1426 = vst [vmem:[%s175 + $0xf8] sm:$0xff] %v1378
        %1427 = vst [vmem:[%s175 + $0x100] sm:$0xff] %v1379
        %1428 = vst [vmem:[%s175 + $0x108] sm:$0xff] %v1380
        %1429 = vst [vmem:[%s175 + $0x110] sm:$0xff] %v1381
        %1430 = vst [vmem:[%s175 + $0x118] sm:$0xff] %v1382
        %1431 = vst [vmem:[%s175 + $0x120] sm:$0xff] %v1383
        %1432 = vst [vmem:[%s175 + $0x128] sm:$0xff] %v1384
        %1433 = vst [vmem:[%s175 + $0x130] sm:$0xff] %v1385
        %1434 = vst [vmem:[%s175 + $0x138] sm:$0xff] %v1386
        %1435 = vst [vmem:[%s175 + $0x140] sm:$0xff] %v1387
        %1436 = vst [vmem:[%s175 + $0x148] sm:$0xff] %v1388
        %1437 = vst [vmem:[%s175 + $0x150] sm:$0xff] %v1389
        %1438 = vst [vmem:[%s175 + $0x158] sm:$0xff] %v1390
        %1439 = vst [vmem:[%s175 + $0x160] sm:$0xff] %v1391
        %1440 = vst [vmem:[%s175 + $0x168] sm:$0xff] %v1392
        %1441 = vst [vmem:[%s175 + $0x170] sm:$0xff] %v1393
        %1442 = vst [vmem:[%s175 + $0x178] sm:$0xff] %v1394
        %s1443 = sand.u32 %s75, 1
        %s1444 = scalar_lea.sflag [#allocation4], %s1443
        %s1445 = sand.u32 %s75, 1
        %s1446 = smul.addr %s1445, 384
        %s1447 = scalar_lea.vmem [#allocation7], %s1446
        // Predicated region
        $region37: #{tpu_custom_call.1} parent=27 // pred_check
          %p1448 = pneg %p85
        $region38: #{tpu_custom_call.1} parent=27 // pred_check_branch
          %1450 = sbr.rel (%p1448) target = $region40
        $region39: #{tpu_custom_call.1} parent=27 // pred_region
          %s1451 = smul.u32 16, %s20
          %s1453 = ssub.s32 6144, 6144
          %1454 = vsyncadd %s1444, %s1453
          %s1455 = smul.addr %s1451, 3
          %s1456 = smul.addr %s1455, 128
          %s1457 = scalar_lea.hbm %s2, %s1456
          %s1458 = sshll.u32 %s1447, 4
          %s1459 = int_to_ptr.vmem [resolvable:$true] %s1458
          %1464 = dma.vmem_to_hbm [thread:$0]  %s1459, 6144, %s1457, %s1444, 384, 384, 24
        $region40: #{tpu_custom_call.1} parent=27 // pred_fallthru
          _
      $region28: #{tpu_custom_call.1} parent=5 // pred_fallthru
        _
      %p1465 = scmp.le.s32.totalorder 2, %s15
      // Predicated region
      $region41: #{tpu_custom_call.1} parent=5 // pred_check
        %p1466 = pneg %p1465
      $region42: #{tpu_custom_call.1} parent=5 // pred_check_branch
        %1468 = sbr.rel (%p1466) target = $region44
      $region43: #{tpu_custom_call.1} parent=5 // pred_region
        %s1469 = ssub.s32 %s15, 2
        // Predicated region
        $region45: #{tpu_custom_call.1} parent=43 // pred_check
          %p1470 = pneg %p91
        $region46: #{tpu_custom_call.1} parent=43 // pred_check_branch
          %1472 = sbr.rel (%p1470) target = $region48
        $region47: #{tpu_custom_call.1} parent=43 // pred_region
          %s1473 = sand.u32 %s76, 1
          %s1474 = scalar_lea.sflag [#allocation4], %s1473
          %s1475 = sand.u32 %s76, 1
          %s1476 = smul.addr %s1475, 384
          %s1477 = scalar_lea.vmem [#allocation7], %s1476
          %1478 = dma.done %s1474, 6144
        $region48: #{tpu_custom_call.1} parent=43 // pred_fallthru
          _
      $region44: #{tpu_custom_call.1} parent=5 // pred_fallthru
        _
    $region6: #{tpu_custom_call.1} parent=1 // loop_footer
      %s19 = sadd.s32 1, %s15
    $region7: #{tpu_custom_call.1} parent=1 // loop_footer_branch
      %14 = sbr.rel target = $region3
    $region8: #{tpu_custom_call.1} parent=1 // loop_exit
      _
    %1479 = vsyncpa [#allocation3], 1
    %s1480 = scalar_lea.sflag [#allocation3], 1
    %1481 = vsyncpa %s1480, 1
    %1482 = vsyncpa [#allocation6], 1
    %s1483 = scalar_lea.sflag [#allocation6], 1
    %1484 = vsyncpa %s1483, 1
    %1485 = vsyncpa [#allocation4], 1
    %s1486 = scalar_lea.sflag [#allocation4], 1
    %1487 = vsyncpa %s1486, 1

</llo_original>
